<compile_context>
chip_gen: v7x
topology: tpu7x:2x2x1
jax: 0.10.0
libtpu: 0.0.40
codegen_flags: <defaults>
</compile_context>

<pallas_src>
import functools

import jax
import jax.numpy as jnp
from jax.experimental import pallas as pl
from jax.experimental.pallas import tpu as pltpu

HIDDEN = 1024
OUT = 50
OUT_PAD = 128          # lane-dense padded output width (multiple of 128)
TN = 256               # hidden-feature tile (HIDDEN / TN grid steps)
BN_EPS = 1e-5


def _discriminator_kernel(x_ref, w1_ref, b1_ref, gamma_ref, beta_ref,
                          w2_ref, b2_ref, o_ref, acc_ref, *, batch):
    j = pl.program_id(0)

    @pl.when(j == 0)
    def _():
        acc_ref[...] = jnp.zeros_like(acc_ref)

    # ---- Linear(n_input, TN): feature slice of the hidden layer (MXU) ----
    h = jnp.dot(x_ref[...], w1_ref[...],
                preferred_element_type=jnp.float32) + b1_ref[...]

    # ---- BatchNorm1d (training-mode batch stats), one-pass, folded ----
    b_pad = h.shape[0]
    if b_pad != batch:
        # Zero-padded batch rows must not contribute to the statistics.
        row = jax.lax.broadcasted_iota(jnp.int32, (b_pad, 1), 0)
        hm = jnp.where(row < batch, h, 0.0)
    else:
        hm = h
    inv_n = 1.0 / batch
    mean = jnp.sum(hm, axis=0, keepdims=True) * inv_n       # E[h]
    ex2 = jnp.sum(hm * h, axis=0, keepdims=True) * inv_n    # E[h^2]
    var = ex2 - mean * mean                                 # biased variance
    scale = gamma_ref[...] * jax.lax.rsqrt(var + BN_EPS)    # gamma / std
    shift = beta_ref[...] - mean * scale
    h = jnp.maximum(h * scale + shift, 0.0)                 # BN + ReLU

    # ---- Linear(TN, OUT_PAD): partial product, accumulated over tiles ----
    acc_ref[...] += jnp.dot(h, w2_ref[...], preferred_element_type=jnp.float32)

    @pl.when(j == pl.num_programs(0) - 1)
    def _():
        logits = acc_ref[...] + b2_ref[...]
        o_ref[...] = pl.reciprocal(1.0 + jnp.exp(-logits)).astype(o_ref.dtype)


def discriminator_forward(x, params, *, tn=TN):
    """x: (B, n_input) float32. params: w1 (n_in,1024), b1/gamma/beta (1,1024),
    w2 (1024,50), b2 (1,50). Returns (B, 50) float32."""
    B, n_input = x.shape
    b_pad = ((B + 7) // 8) * 8                 # sublane-align the batch dim
    if b_pad != B:
        x = jnp.pad(x, ((0, b_pad - B), (0, 0)))

    # Zero-pad the second linear layer to a lane-dense width (50 -> 128).
    w2 = jnp.pad(params["w2"], ((0, 0), (0, OUT_PAD - OUT)))
    b2 = jnp.pad(params["b2"], ((0, 0), (0, OUT_PAD - OUT)))

    assert HIDDEN % tn == 0
    grid = (HIDDEN // tn,)
    # TODO(synk): for very large n_input, add an inner K grid axis with an h
    # accumulator so w1 VMEM use becomes independent of n_input.

    out = pl.pallas_call(
        functools.partial(_discriminator_kernel, batch=B),
        out_shape=jax.ShapeDtypeStruct((b_pad, OUT_PAD), jnp.float32),
        grid=grid,
        in_specs=[
            pl.BlockSpec((b_pad, n_input), lambda j: (0, 0)),  # x (resident)
            pl.BlockSpec((n_input, tn), lambda j: (0, j)),     # w1 feature tile
            pl.BlockSpec((1, tn), lambda j: (0, j)),           # b1
            pl.BlockSpec((1, tn), lambda j: (0, j)),           # gamma
            pl.BlockSpec((1, tn), lambda j: (0, j)),           # beta
            pl.BlockSpec((tn, OUT_PAD), lambda j: (j, 0)),     # w2 tile
            pl.BlockSpec((1, OUT_PAD), lambda j: (0, 0)),      # b2
        ],
        out_specs=pl.BlockSpec((b_pad, OUT_PAD), lambda j: (0, 0)),
        scratch_shapes=[pltpu.VMEM((b_pad, OUT_PAD), jnp.float32)],
        compiler_params=pltpu.CompilerParams(
            dimension_semantics=("arbitrary",),   # output accumulated over axis
            vmem_limit_bytes=48 << 20,            # v7x-safe (64 MiB physical)
        ),
    )(x, params["w1"], params["b1"], params["gamma"], params["beta"], w2, b2)

    return out[:B, :OUT]


def init_params(key, n_input):
    """Deterministic synthetic parameters matching the PyTorch module shapes.
    PyTorch Linear weight is (out, in); we store it pre-transposed as (in, out)."""
    k1, k2, k3, k4 = jax.random.split(key, 4)
    bound1 = 1.0 / jnp.sqrt(n_input)
    bound2 = 1.0 / jnp.sqrt(HIDDEN)
    return {
        "w1": jax.random.uniform(k1, (n_input, HIDDEN), jnp.float32, -bound1, bound1),
        "b1": jax.random.uniform(k2, (1, HIDDEN), jnp.float32, -bound1, bound1),
        # BatchNorm1d default affine params: weight=1, bias=0
        "gamma": jnp.ones((1, HIDDEN), jnp.float32),
        "beta": jnp.zeros((1, HIDDEN), jnp.float32),
        "w2": jax.random.uniform(k3, (HIDDEN, OUT), jnp.float32, -bound2, bound2),
        "b2": jax.random.uniform(k4, (1, OUT), jnp.float32, -bound2, bound2),
    }


def _reference(x, p):
    h = x @ p["w1"] + p["b1"]
    mean = h.mean(axis=0, keepdims=True)
    var = ((h - mean) ** 2).mean(axis=0, keepdims=True)
    h = (h - mean) / jnp.sqrt(var + BN_EPS) * p["gamma"] + p["beta"]
    h = jnp.maximum(h, 0.0)
    return jax.nn.sigmoid(h @ p["w2"] + p["b2"])


if __name__ == "__main__":
    key = jax.random.PRNGKey(0)
    kx, kp = jax.random.split(key)

    B, n_input = 8, 32
    x = jax.random.normal(kx, (B, n_input), jnp.float32)
    params = init_params(kp, n_input)

    out = jax.block_until_ready(discriminator_forward(x, params))
    ref = _reference(x, params)

    assert out.shape == (B, OUT)
    assert jnp.allclose(out, ref, atol=5e-5, rtol=5e-5), "mismatch vs reference"

    print("KERNEL_OK")
</pallas_src>

<mosaic_0001>
module attributes {stable_mosaic.version = 11 : i64} {
  func.func @_discriminator_kernel(%arg0: i32, %arg1: memref<8x32xf32, #tpu.memory_space<vmem>>, %arg2: memref<32x256xf32, #tpu.memory_space<vmem>>, %arg3: memref<1x256xf32, #tpu.memory_space<vmem>>, %arg4: memref<1x256xf32, #tpu.memory_space<vmem>>, %arg5: memref<1x256xf32, #tpu.memory_space<vmem>>, %arg6: memref<256x128xf32, #tpu.memory_space<vmem>>, %arg7: memref<1x128xf32, #tpu.memory_space<vmem>>, %arg8: memref<8x128xf32, #tpu.memory_space<vmem>>, %arg9: memref<8x128xf32, #tpu.memory_space<vmem>>) attributes {dimension_semantics = [#tpu.dimension_semantics<arbitrary>], iteration_bounds = array<i64: 4>, scalar_prefetch = 0 : i64, scratch_operands = 1 : i64, tpu.core_type = #tpu.core_type<tc>, window_params = [{pipeline_mode = #tpu.pipeline_mode<synchronous>, transform_indices = @transform_0, window_bounds = array<i64: 8, 32>}, {transform_indices = @transform_1, window_bounds = array<i64: 32, 256>}, {transform_indices = @transform_2, window_bounds = array<i64: 1, 256>}, {transform_indices = @transform_3, window_bounds = array<i64: 1, 256>}, {transform_indices = @transform_4, window_bounds = array<i64: 1, 256>}, {transform_indices = @transform_5, window_bounds = array<i64: 256, 128>}, {pipeline_mode = #tpu.pipeline_mode<synchronous>, transform_indices = @transform_6, window_bounds = array<i64: 1, 128>}, {pipeline_mode = #tpu.pipeline_mode<synchronous>, transform_indices = @transform_7, window_bounds = array<i64: 8, 128>}]} {
    %c0_i32 = arith.constant 0 : i32
    %0 = arith.cmpi eq, %arg0, %c0_i32 : i32
    %1 = arith.extui %0 : i1 to i32
    %c0_i32_0 = arith.constant 0 : i32
    %2 = arith.cmpi ne, %1, %c0_i32_0 : i32
    scf.if %2 {
      %cst_24 = arith.constant 0.000000e+00 : f32
      %42 = vector.broadcast %cst_24 : f32 to vector<8x128xf32>
      %c0_25 = arith.constant 0 : index
      %c0_26 = arith.constant 0 : index
      %43 = vector.load %arg9[%c0_25, %c0_26] : memref<8x128xf32, #tpu.memory_space<vmem>>, vector<8x128xf32>
      tpu.vector_store %arg9[%c0_25, %c0_26], %42 {strides = array<i32>} : memref<8x128xf32, #tpu.memory_space<vmem>>, vector<8x128xf32>,
    } else {
    }
    %c0 = arith.constant 0 : index
    %c0_1 = arith.constant 0 : index
    %3 = vector.load %arg1[%c0, %c0_1] : memref<8x32xf32, #tpu.memory_space<vmem>>, vector<8x32xf32>
    %c0_2 = arith.constant 0 : index
    %c0_3 = arith.constant 0 : index
    %4 = vector.load %arg2[%c0_2, %c0_3] : memref<32x256xf32, #tpu.memory_space<vmem>>, vector<32x256xf32>
    %cst = arith.constant dense<0.000000e+00> : vector<8x256xf32>
    %5 = tpu.matmul %3, %4, %cst {dimension_numbers = #tpu.dot_dimension_numbers<[1], [0], [0], [1], [0, 0, 1, 1], [], []>} : vector<8x32xf32>, vector<32x256xf32>, vector<8x256xf32> -> vector<8x256xf32>
    %c0_4 = arith.constant 0 : index
    %c0_5 = arith.constant 0 : index
    %6 = vector.load %arg3[%c0_4, %c0_5] : memref<1x256xf32, #tpu.memory_space<vmem>>, vector<1x256xf32>
    %7 = vector.broadcast %6 : vector<1x256xf32> to vector<8x256xf32>
    %8 = arith.addf %5, %7 : vector<8x256xf32>
    %cst_6 = arith.constant dense<0.000000e+00> : vector<256xf32>
    %9 = vector.multi_reduction <add>, %8, %cst_6 [0] : vector<8x256xf32> to vector<256xf32>
    %10 = vector.shape_cast %9 : vector<256xf32> to vector<1x256xf32>
    %cst_7 = arith.constant 1.250000e-01 : f32
    %11 = vector.broadcast %cst_7 : f32 to vector<1x256xf32>
    %12 = arith.mulf %10, %11 : vector<1x256xf32>
    %13 = arith.mulf %8, %8 : vector<8x256xf32>
    %cst_8 = arith.constant dense<0.000000e+00> : vector<256xf32>
    %14 = vector.multi_reduction <add>, %13, %cst_8 [0] : vector<8x256xf32> to vector<256xf32>
    %15 = vector.shape_cast %14 : vector<256xf32> to vector<1x256xf32>
    %cst_9 = arith.constant 1.250000e-01 : f32
    %16 = vector.broadcast %cst_9 : f32 to vector<1x256xf32>
    %17 = arith.mulf %15, %16 : vector<1x256xf32>
    %18 = arith.mulf %12, %12 : vector<1x256xf32>
    %19 = arith.subf %17, %18 : vector<1x256xf32>
    %c0_10 = arith.constant 0 : index
    %c0_11 = arith.constant 0 : index
    %20 = vector.load %arg4[%c0_10, %c0_11] : memref<1x256xf32, #tpu.memory_space<vmem>>, vector<1x256xf32>
    %cst_12 = arith.constant 9.99999974E-6 : f32
    %21 = vector.broadcast %cst_12 : f32 to vector<1x256xf32>
    %22 = arith.addf %19, %21 : vector<1x256xf32>
    %23 = math.rsqrt %22 : vector<1x256xf32>
    %24 = arith.mulf %20, %23 : vector<1x256xf32>
    %c0_13 = arith.constant 0 : index
    %c0_14 = arith.constant 0 : index
    %25 = vector.load %arg5[%c0_13, %c0_14] : memref<1x256xf32, #tpu.memory_space<vmem>>, vector<1x256xf32>
    %26 = arith.mulf %12, %24 : vector<1x256xf32>
    %27 = arith.subf %25, %26 : vector<1x256xf32>
    %28 = vector.broadcast %24 : vector<1x256xf32> to vector<8x256xf32>
    %29 = arith.mulf %8, %28 : vector<8x256xf32>
    %30 = vector.broadcast %27 : vector<1x256xf32> to vector<8x256xf32>
    %31 = arith.addf %29, %30 : vector<8x256xf32>
    %cst_15 = arith.constant 0.000000e+00 : f32
    %32 = vector.broadcast %cst_15 : f32 to vector<8x256xf32>
    %33 = arith.maximumf %31, %32 : vector<8x256xf32>
    %c0_16 = arith.constant 0 : index
    %c0_17 = arith.constant 0 : index
    %34 = vector.load %arg9[%c0_16, %c0_17] : memref<8x128xf32, #tpu.memory_space<vmem>>, vector<8x128xf32>
    %c0_18 = arith.constant 0 : index
    %c0_19 = arith.constant 0 : index
    %35 = vector.load %arg6[%c0_18, %c0_19] : memref<256x128xf32, #tpu.memory_space<vmem>>, vector<256x128xf32>
    %cst_20 = arith.constant dense<0.000000e+00> : vector<8x128xf32>
    %36 = tpu.matmul %33, %35, %cst_20 {dimension_numbers = #tpu.dot_dimension_numbers<[1], [0], [0], [1], [0, 0, 1, 1], [], []>} : vector<8x256xf32>, vector<256x128xf32>, vector<8x128xf32> -> vector<8x128xf32>
    %37 = arith.addf %34, %36 : vector<8x128xf32>
    %c0_21 = arith.constant 0 : index
    %c0_22 = arith.constant 0 : index
    %38 = vector.load %arg9[%c0_21, %c0_22] : memref<8x128xf32, #tpu.memory_space<vmem>>, vector<8x128xf32>
    tpu.vector_store %arg9[%c0_21, %c0_22], %37 {strides = array<i32>} : memref<8x128xf32, #tpu.memory_space<vmem>>, vector<8x128xf32>,
    %c3_i32 = arith.constant 3 : i32
    %39 = arith.cmpi eq, %arg0, %c3_i32 : i32
    %40 = arith.extui %39 : i1 to i32
    %c0_i32_23 = arith.constant 0 : i32
    %41 = arith.cmpi ne, %40, %c0_i32_23 : i32
    scf.if %41 {
      %c0_24 = arith.constant 0 : index
      %c0_25 = arith.constant 0 : index
      %42 = vector.load %arg9[%c0_24, %c0_25] : memref<8x128xf32, #tpu.memory_space<vmem>>, vector<8x128xf32>
      %c0_26 = arith.constant 0 : index
      %c0_27 = arith.constant 0 : index
      %43 = vector.load %arg7[%c0_26, %c0_27] : memref<1x128xf32, #tpu.memory_space<vmem>>, vector<1x128xf32>
      %44 = vector.broadcast %43 : vector<1x128xf32> to vector<8x128xf32>
      %45 = arith.addf %42, %44 : vector<8x128xf32>
      %cst_28 = arith.constant 0.000000e+00 : f32
      %46 = vector.broadcast %cst_28 : f32 to vector<8x128xf32>
      %47 = arith.subf %46, %45 : vector<8x128xf32>
      %48 = math.exp %47 : vector<8x128xf32>
      %cst_29 = arith.constant 1.000000e+00 : f32
      %49 = vector.broadcast %cst_29 : f32 to vector<8x128xf32>
      %50 = arith.addf %49, %48 : vector<8x128xf32>
      %51 = tpu.reciprocal %50 : vector<8x128xf32> -> vector<8x128xf32>
      %c0_30 = arith.constant 0 : index
      %c0_31 = arith.constant 0 : index
      %52 = vector.load %arg8[%c0_30, %c0_31] : memref<8x128xf32, #tpu.memory_space<vmem>>, vector<8x128xf32>
      tpu.vector_store %arg8[%c0_30, %c0_31], %51 {strides = array<i32>} : memref<8x128xf32, #tpu.memory_space<vmem>>, vector<8x128xf32>,
    } else {
    }
    return
  }
  func.func @transform_0(%arg0: i32) -> (i32, i32) {
    %c0_i32 = arith.constant 0 : i32
    %c0_i32_0 = arith.constant 0 : i32
    %c0_i32_1 = arith.constant 0 : i32
    return %c0_i32, %c0_i32_0 : i32, i32
  }
  func.func @transform_1(%arg0: i32) -> (i32, i32) {
    %c0_i32 = arith.constant 0 : i32
    %c0_i32_0 = arith.constant 0 : i32
    return %c0_i32, %arg0 : i32, i32
  }
  func.func @transform_2(%arg0: i32) -> (i32, i32) {
    %c0_i32 = arith.constant 0 : i32
    %c0_i32_0 = arith.constant 0 : i32
    return %c0_i32, %arg0 : i32, i32
  }
  func.func @transform_3(%arg0: i32) -> (i32, i32) {
    %c0_i32 = arith.constant 0 : i32
    %c0_i32_0 = arith.constant 0 : i32
    return %c0_i32, %arg0 : i32, i32
  }
  func.func @transform_4(%arg0: i32) -> (i32, i32) {
    %c0_i32 = arith.constant 0 : i32
    %c0_i32_0 = arith.constant 0 : i32
    return %c0_i32, %arg0 : i32, i32
  }
  func.func @transform_5(%arg0: i32) -> (i32, i32) {
    %c0_i32 = arith.constant 0 : i32
    %c0_i32_0 = arith.constant 0 : i32
    return %arg0, %c0_i32 : i32, i32
  }
  func.func @transform_6(%arg0: i32) -> (i32, i32) {
    %c0_i32 = arith.constant 0 : i32
    %c0_i32_0 = arith.constant 0 : i32
    %c0_i32_1 = arith.constant 0 : i32
    return %c0_i32, %c0_i32_0 : i32, i32
  }
  func.func @transform_7(%arg0: i32) -> (i32, i32) {
    %c0_i32 = arith.constant 0 : i32
    %c0_i32_0 = arith.constant 0 : i32
    %c0_i32_1 = arith.constant 0 : i32
    return %c0_i32, %c0_i32_0 : i32, i32
  }
}

</mosaic_0001>

<llo_original>
// kernel: tpu_custom_call.1
$region0: #{tpu_custom_call.1}
  #allocation0 [shape = 'u32[]', space=smem, size = 0x4, offset = 0x4, fixed_abs, tag = 'smem constant byte address 0x4 - core index']
  #allocation1 [shape = 'u32[144,128]{1,0:T(1,128)}', space=vmem, size = 0x12000, scoped, tag = 'internal scratch']
  #allocation2 [shape = 'f32[8,128]{1,0:T(8,128)}', space=vmem, size = 0x1000, scoped, tag = 'scratch operand']
  %s0 = inlined_call_operand.hbm [shape: f32[8,32], index: 0, kind: input, shape index: {}]
  %s1 = inlined_call_operand.hbm [shape: f32[32,1024], index: 1, kind: input, shape index: {}]
  %s2 = inlined_call_operand.hbm [shape: f32[1,1024], index: 2, kind: input, shape index: {}]
  %s3 = inlined_call_operand.vmem [shape: f32[1,1024], index: 3, kind: input, shape index: {}]
  %s4 = inlined_call_operand.hbm [shape: f32[1,1024], index: 4, kind: input, shape index: {}]
  %s5 = inlined_call_operand.hbm [shape: f32[1024,128], index: 5, kind: input, shape index: {}]
  %s6 = inlined_call_operand.vmem [shape: f32[1,128], index: 6, kind: input, shape index: {}]
  %s7 = inlined_call_operand.hbm [shape: f32[8,128], index: 7, kind: output, shape index: {}]
  %s8 = sld [smem:[#allocation0]]
  $region89: #{tpu_custom_call.1} parent=0
    _
  %s10 = ssub.s32 1, %s8
  %s11 = scalar_select 0, %s10, %s8
  $region1: #{tpu_custom_call.1} parent=0
    #allocation3 [shape = 'u8[4096]{0}', space=vmem, size = 0x1000, scoped, tag = 'input window, operand 0, single buffered']
    #allocation4 [shape = 's32[2]{0}', space=sflag, size = 0x8, scoped, tag = 'scoped memory for tpu_custom_call.1']
    #allocation5 [shape = 's32[2]{0}', space=sflag, size = 0x8, scoped, tag = 'scoped memory for tpu_custom_call.1']
    #allocation6 [shape = 'u8[65536]{0}', space=vmem, size = 0x10000, scoped, tag = 'input window, operand 1']
    #allocation7 [shape = 's32[2]{0}', space=sflag, size = 0x8, scoped, tag = 'scoped memory for tpu_custom_call.1']
    #allocation8 [shape = 'u8[2048]{0}', space=vmem, size = 0x800, scoped, tag = 'input window, operand 2']
    #allocation9 [shape = 'u8[2048]{0}', space=vmem, size = 0x800, scoped, tag = 'input window, operand 4']
    #allocation10 [shape = 's32[2]{0}', space=sflag, size = 0x8, scoped, tag = 'scoped memory for tpu_custom_call.1']
    #allocation11 [shape = 'u8[262144]{0}', space=vmem, size = 0x40000, scoped, tag = 'input window, operand 5']
    #allocation12 [shape = 'u8[4096]{0}', space=vmem, size = 0x1000, scoped, tag = 'output window, operand 0, single buffered']
    %12 = vsyncpa [#allocation4], 0
    %13 = vsyncpa [#allocation7], 0
    %s14 = scalar_lea.sflag [#allocation7], 1
    %15 = vsyncpa %s14, 0
    %16 = vsyncpa [#allocation10], 0
    %s17 = scalar_lea.sflag [#allocation10], 1
    %18 = vsyncpa %s17, 0
    %19 = vsyncpa [#allocation5], 0
    loop: start=0, step=1, limit=6
    $region2: #{tpu_custom_call.1} parent=1 // loop_pre_header
      _
    $region3: #{tpu_custom_call.1} parent=1 // loop_header
      %s21 = sphi 0, %s25
      %p22 = scmp.ge.s32.totalorder %s21, 6
      %s29 = sphi 0, %s29
      %s31 = sphi 0, %s29
      %s32 = sphi 0, %s31
      %s46 = sphi 0, %s32
      %s52 = sphi 0, %s54
      %s55 = sphi 0, %s52
      %s56 = sphi 0, %s55
      %s72 = sphi 0, %s56
      %s78 = sphi 0, %s80
      %s81 = sphi 0, %s78
      %s82 = sphi 0, %s81
      %s98 = sphi 0, %s82
      %s104 = sphi 0, %s106
      %s107 = sphi 0, %s104
      %s108 = sphi 0, %s107
      %s124 = sphi 0, %s108
      %s130 = sphi 0, %s132
      %s133 = sphi 0, %s130
      %s134 = sphi 0, %s133
      %s150 = sphi 0, %s134
      %s156 = sphi 0, %s158
      %s159 = sphi 0, %s156
      %s160 = sphi 0, %s159
      %s176 = sphi 0, %s160
      %s180 = sphi 0, %s180
      %s182 = sphi 0, %s180
      %s183 = sphi 0, %s182
      %s197 = sphi 0, %s183
      %s201 = sphi 0, %s201
      %s203 = sphi 0, %s201
      %s204 = sphi 0, %s203
      %s218 = sphi 0, %s204
    $region4: #{tpu_custom_call.1} parent=1 // loop_header_branch
      %24 = sbr.rel (%p22) target = $region8
    $region5: #{tpu_custom_call.1} parent=1 // loop_body
      %s26 = ssub.s32 %s21, 1
      %s27 = ssub.s32 %s21, 2
      %s28 = sadd.s32 %s21, 1
      %s30 = sadd.s32 %s29, 1
      %p33 = scmp.eq.s32.totalorder %s21, 3
      %p34 = scmp.ne.s32.totalorder %s29, %s31
      %p35 = scmp.eq.s32.totalorder %s21, 0
      %p36 = por %p34, %p35
      %p37 = scmp.ne.s32.totalorder %s29, %s31
      %p38 = scmp.eq.s32.totalorder %s26, 3
      %p39 = por %p37, %p38
      %p40 = scmp.ne.s32.totalorder %s31, %s32
      %p41 = scmp.eq.s32.totalorder %s26, 0
      %p42 = por %p40, %p41
      %p43 = scmp.ne.s32.totalorder %s31, %s32
      %p44 = scmp.eq.s32.totalorder %s27, 3
      %p45 = por %p43, %p44
      %p47 = scmp.ne.s32.totalorder %s32, %s46
      %p48 = scmp.eq.s32.totalorder %s27, 0
      %p49 = por %p47, %p48
      %s50 = ssub.s32 %s21, %s28
      %p51 = scmp.eq.s32.totalorder %s50, 0
      %s53 = sadd.s32 %s52, 1
      %s54 = scalar_select %p51, %s52, %s53
      %p57 = pneg %p51
      %p58 = scmp.eq.s32.totalorder %s21, 3
      %p59 = por %p57, %p58
      %p60 = scmp.ne.s32.totalorder %s52, %s55
      %p61 = scmp.eq.s32.totalorder %s21, 0
      %p62 = por %p60, %p61
      %p63 = scmp.ne.s32.totalorder %s52, %s55
      %p64 = scmp.eq.s32.totalorder %s26, 3
      %p65 = por %p63, %p64
      %p66 = scmp.ne.s32.totalorder %s55, %s56
      %p67 = scmp.eq.s32.totalorder %s26, 0
      %p68 = por %p66, %p67
      %p69 = scmp.ne.s32.totalorder %s55, %s56
      %p70 = scmp.eq.s32.totalorder %s27, 3
      %p71 = por %p69, %p70
      %p73 = scmp.ne.s32.totalorder %s56, %s72
      %p74 = scmp.eq.s32.totalorder %s27, 0
      %p75 = por %p73, %p74
      %s76 = ssub.s32 %s21, %s28
      %p77 = scmp.eq.s32.totalorder %s76, 0
      %s79 = sadd.s32 %s78, 1
      %s80 = scalar_select %p77, %s78, %s79
      %p83 = pneg %p77
      %p84 = scmp.eq.s32.totalorder %s21, 3
      %p85 = por %p83, %p84
      %p86 = scmp.ne.s32.totalorder %s78, %s81
      %p87 = scmp.eq.s32.totalorder %s21, 0
      %p88 = por %p86, %p87
      %p89 = scmp.ne.s32.totalorder %s78, %s81
      %p90 = scmp.eq.s32.totalorder %s26, 3
      %p91 = por %p89, %p90
      %p92 = scmp.ne.s32.totalorder %s81, %s82
      %p93 = scmp.eq.s32.totalorder %s26, 0
      %p94 = por %p92, %p93
      %p95 = scmp.ne.s32.totalorder %s81, %s82
      %p96 = scmp.eq.s32.totalorder %s27, 3
      %p97 = por %p95, %p96
      %p99 = scmp.ne.s32.totalorder %s82, %s98
      %p100 = scmp.eq.s32.totalorder %s27, 0
      %p101 = por %p99, %p100
      %s102 = ssub.s32 %s21, %s28
      %p103 = scmp.eq.s32.totalorder %s102, 0
      %s105 = sadd.s32 %s104, 1
      %s106 = scalar_select %p103, %s104, %s105
      %p109 = pneg %p103
      %p110 = scmp.eq.s32.totalorder %s21, 3
      %p111 = por %p109, %p110
      %p112 = scmp.ne.s32.totalorder %s104, %s107
      %p113 = scmp.eq.s32.totalorder %s21, 0
      %p114 = por %p112, %p113
      %p115 = scmp.ne.s32.totalorder %s104, %s107
      %p116 = scmp.eq.s32.totalorder %s26, 3
      %p117 = por %p115, %p116
      %p118 = scmp.ne.s32.totalorder %s107, %s108
      %p119 = scmp.eq.s32.totalorder %s26, 0
      %p120 = por %p118, %p119
      %p121 = scmp.ne.s32.totalorder %s107, %s108
      %p122 = scmp.eq.s32.totalorder %s27, 3
      %p123 = por %p121, %p122
      %p125 = scmp.ne.s32.totalorder %s108, %s124
      %p126 = scmp.eq.s32.totalorder %s27, 0
      %p127 = por %p125, %p126
      %s128 = ssub.s32 %s21, %s28
      %p129 = scmp.eq.s32.totalorder %s128, 0
      %s131 = sadd.s32 %s130, 1
      %s132 = scalar_select %p129, %s130, %s131
      %p135 = pneg %p129
      %p136 = scmp.eq.s32.totalorder %s21, 3
      %p137 = por %p135, %p136
      %p138 = scmp.ne.s32.totalorder %s130, %s133
      %p139 = scmp.eq.s32.totalorder %s21, 0
      %p140 = por %p138, %p139
      %p141 = scmp.ne.s32.totalorder %s130, %s133
      %p142 = scmp.eq.s32.totalorder %s26, 3
      %p143 = por %p141, %p142
      %p144 = scmp.ne.s32.totalorder %s133, %s134
      %p145 = scmp.eq.s32.totalorder %s26, 0
      %p146 = por %p144, %p145
      %p147 = scmp.ne.s32.totalorder %s133, %s134
      %p148 = scmp.eq.s32.totalorder %s27, 3
      %p149 = por %p147, %p148
      %p151 = scmp.ne.s32.totalorder %s134, %s150
      %p152 = scmp.eq.s32.totalorder %s27, 0
      %p153 = por %p151, %p152
      %s154 = ssub.s32 %s21, %s28
      %p155 = scmp.eq.s32.totalorder %s154, 0
      %s157 = sadd.s32 %s156, 1
      %s158 = scalar_select %p155, %s156, %s157
      %p161 = pneg %p155
      %p162 = scmp.eq.s32.totalorder %s21, 3
      %p163 = por %p161, %p162
      %p164 = scmp.ne.s32.totalorder %s156, %s159
      %p165 = scmp.eq.s32.totalorder %s21, 0
      %p166 = por %p164, %p165
      %p167 = scmp.ne.s32.totalorder %s156, %s159
      %p168 = scmp.eq.s32.totalorder %s26, 3
      %p169 = por %p167, %p168
      %p170 = scmp.ne.s32.totalorder %s159, %s160
      %p171 = scmp.eq.s32.totalorder %s26, 0
      %p172 = por %p170, %p171
      %p173 = scmp.ne.s32.totalorder %s159, %s160
      %p174 = scmp.eq.s32.totalorder %s27, 3
      %p175 = por %p173, %p174
      %p177 = scmp.ne.s32.totalorder %s160, %s176
      %p178 = scmp.eq.s32.totalorder %s27, 0
      %p179 = por %p177, %p178
      %s181 = sadd.s32 %s180, 1
      %p184 = scmp.eq.s32.totalorder %s21, 3
      %p185 = scmp.ne.s32.totalorder %s180, %s182
      %p186 = scmp.eq.s32.totalorder %s21, 0
      %p187 = por %p185, %p186
      %p188 = scmp.ne.s32.totalorder %s180, %s182
      %p189 = scmp.eq.s32.totalorder %s26, 3
      %p190 = por %p188, %p189
      %p191 = scmp.ne.s32.totalorder %s182, %s183
      %p192 = scmp.eq.s32.totalorder %s26, 0
      %p193 = por %p191, %p192
      %p194 = scmp.ne.s32.totalorder %s182, %s183
      %p195 = scmp.eq.s32.totalorder %s27, 3
      %p196 = por %p194, %p195
      %p198 = scmp.ne.s32.totalorder %s183, %s197
      %p199 = scmp.eq.s32.totalorder %s27, 0
      %p200 = por %p198, %p199
      %s202 = sadd.s32 %s201, 1
      %p205 = scmp.eq.s32.totalorder %s21, 3
      %p206 = scmp.ne.s32.totalorder %s201, %s203
      %p207 = scmp.eq.s32.totalorder %s21, 0
      %p208 = por %p206, %p207
      %p209 = scmp.ne.s32.totalorder %s201, %s203
      %p210 = scmp.eq.s32.totalorder %s26, 3
      %p211 = por %p209, %p210
      %p212 = scmp.ne.s32.totalorder %s203, %s204
      %p213 = scmp.eq.s32.totalorder %s26, 0
      %p214 = por %p212, %p213
      %p215 = scmp.ne.s32.totalorder %s203, %s204
      %p216 = scmp.eq.s32.totalorder %s27, 3
      %p217 = por %p215, %p216
      %p219 = scmp.ne.s32.totalorder %s204, %s218
      %p220 = scmp.eq.s32.totalorder %s27, 0
      %p221 = por %p219, %p220
      %p222 = scmp.le.s32.totalorder 1, %s21
      %p223 = scmp.lt.s32.totalorder %s21, 5
      %p224 = pnand %p222, %p223
      %p225 = pneg %p224
      // Predicated region
      $region9: #{tpu_custom_call.1} parent=5 // pred_check
        _
      $region10: #{tpu_custom_call.1} parent=5 // pred_check_branch
        %227 = sbr.rel (%p224) target = $region12
      $region11: #{tpu_custom_call.1} parent=5 // pred_region
        %s228 = ssub.s32 %s21, 1
        // Predicated region
        $region13: #{tpu_custom_call.1} parent=11 // pred_check
          %p229 = pneg %p42
        $region14: #{tpu_custom_call.1} parent=11 // pred_check_branch
          %231 = sbr.rel (%p229) target = $region16
        $region15: #{tpu_custom_call.1} parent=11 // pred_region
          %s233 = ssub.s32 128, 128
          %234 = vsyncadd [#allocation4], %s233
          %s236 = sshll.u32 [#allocation3], 4
          %s237 = int_to_ptr.vmem [resolvable:$true] %s236
          %239 = dma.hbm_to_vmem [thread:$0]  %s0, 128, %s237, [#allocation4]
        $region16: #{tpu_custom_call.1} parent=11 // pred_fallthru
          _
        // Predicated region
        $region17: #{tpu_custom_call.1} parent=11 // pred_check
          %p240 = pneg %p193
        $region18: #{tpu_custom_call.1} parent=11 // pred_check_branch
          %242 = sbr.rel (%p240) target = $region20
        $region19: #{tpu_custom_call.1} parent=11 // pred_region
          _
        $region20: #{tpu_custom_call.1} parent=11 // pred_fallthru
          _
      $region12: #{tpu_custom_call.1} parent=5 // pred_fallthru
        _
      %p243 = scmp.lt.s32.totalorder %s21, 4
      // Predicated region
      $region21: #{tpu_custom_call.1} parent=5 // pred_check
        %p244 = pneg %p243
      $region22: #{tpu_custom_call.1} parent=5 // pred_check_branch
        %246 = sbr.rel (%p244) target = $region24
      $region23: #{tpu_custom_call.1} parent=5 // pred_region
        // Predicated region
        $region25: #{tpu_custom_call.1} parent=23 // pred_check
          %p247 = pneg %p62
        $region26: #{tpu_custom_call.1} parent=23 // pred_check_branch
          %249 = sbr.rel (%p247) target = $region28
        $region27: #{tpu_custom_call.1} parent=23 // pred_region
          %s250 = sand.u32 %s21, 1
          %s251 = scalar_lea.sflag [#allocation7], %s250
          %s252 = sand.u32 %s52, 1
          %s253 = smul.addr %s252, 64
          %s254 = scalar_lea.vmem [#allocation6], %s253
          %s255 = smul.u32 2, %s21
          %s257 = ssub.s32 1024, 1024
          %258 = vsyncadd %s251, %s257
          %s259 = smul.addr %s255, 128
          %s260 = scalar_lea.hbm %s1, %s259
          %s261 = sshll.u32 %s254, 4
          %s262 = int_to_ptr.vmem [resolvable:$true] %s261
          %267 = dma.hbm_to_vmem [thread:$0]  %s260, 1024, %s262, %s251, 1024, 256, 16
        $region28: #{tpu_custom_call.1} parent=23 // pred_fallthru
          _
        // Predicated region
        $region29: #{tpu_custom_call.1} parent=23 // pred_check
          %p268 = pneg %p88
        $region30: #{tpu_custom_call.1} parent=23 // pred_check_branch
          %270 = sbr.rel (%p268) target = $region32
        $region31: #{tpu_custom_call.1} parent=23 // pred_region
          %s271 = sand.u32 %s21, 1
          %s272 = scalar_lea.sflag [#allocation7], %s271
          %s273 = sand.u32 %s78, 1
          %s274 = smul.addr %s273, 2
          %s275 = scalar_lea.vmem [#allocation8], %s274
          %s276 = smul.u32 2, %s21
          %s278 = ssub.s32 32, 32
          %279 = vsyncadd %s272, %s278
          %s280 = smul.addr %s276, 16
          %s281 = scalar_lea.hbm %s2, %s280
          %s283 = sshll.u32 %s275, 4
          %s284 = int_to_ptr.vmem [resolvable:$true] %s283
          %286 = dma.hbm_to_vmem [thread:$0]  %s281, 32, %s284, %s272
        $region32: #{tpu_custom_call.1} parent=23 // pred_fallthru
          _
        // Predicated region
        $region33: #{tpu_custom_call.1} parent=23 // pred_check
          %p287 = pneg %p114
        $region34: #{tpu_custom_call.1} parent=23 // pred_check_branch
          %289 = sbr.rel (%p287) target = $region36
        $region35: #{tpu_custom_call.1} parent=23 // pred_region
          %s290 = smul.u32 2, %s21
          %p291 = scmp.lt.s32.totalorder %s290, 7
          %s292 = scalar_select %p291, %s290, 7
          %s293 = scalar_lea.vmem %s3, %s292
          %s294 = smul.u32 2, %s21
        $region36: #{tpu_custom_call.1} parent=23 // pred_fallthru
          _
        // Predicated region
        $region37: #{tpu_custom_call.1} parent=23 // pred_check
          %p295 = pneg %p140
        $region38: #{tpu_custom_call.1} parent=23 // pred_check_branch
          %297 = sbr.rel (%p295) target = $region40
        $region39: #{tpu_custom_call.1} parent=23 // pred_region
          %s298 = sand.u32 %s21, 1
          %s299 = scalar_lea.sflag [#allocation10], %s298
          %s300 = sand.u32 %s130, 1
          %s301 = smul.addr %s300, 2
          %s302 = scalar_lea.vmem [#allocation9], %s301
          %s303 = smul.u32 2, %s21
          %s305 = ssub.s32 32, 32
          %306 = vsyncadd %s299, %s305
          %s307 = smul.addr %s303, 16
          %s308 = scalar_lea.hbm %s4, %s307
          %s310 = sshll.u32 %s302, 4
          %s311 = int_to_ptr.vmem [resolvable:$true] %s310
          %313 = dma.hbm_to_vmem [thread:$0]  %s308, 32, %s311, %s299
        $region40: #{tpu_custom_call.1} parent=23 // pred_fallthru
          _
        // Predicated region
        $region41: #{tpu_custom_call.1} parent=23 // pred_check
          %p314 = pneg %p166
        $region42: #{tpu_custom_call.1} parent=23 // pred_check_branch
          %316 = sbr.rel (%p314) target = $region44
        $region43: #{tpu_custom_call.1} parent=23 // pred_region
          %s317 = sand.u32 %s21, 1
          %s318 = scalar_lea.sflag [#allocation10], %s317
          %s319 = sand.u32 %s156, 1
          %s320 = smul.addr %s319, 256
          %s321 = scalar_lea.vmem [#allocation11], %s320
          %s322 = smul.u32 32, %s21
          %s324 = ssub.s32 4096, 4096
          %325 = vsyncadd %s318, %s324
          %s326 = smul.addr %s322, 128
          %s327 = scalar_lea.hbm %s5, %s326
          %s328 = sshll.u32 %s321, 4
          %s329 = int_to_ptr.vmem [resolvable:$true] %s328
          %334 = dma.hbm_to_vmem [thread:$0]  %s327, 4096, %s329, %s318, 128, 128, 8
        $region44: #{tpu_custom_call.1} parent=23 // pred_fallthru
          _
      $region24: #{tpu_custom_call.1} parent=5 // pred_fallthru
        _
      %p335 = scmp.le.s32.totalorder 1, %s21
      %p336 = scmp.lt.s32.totalorder %s21, 5
      %p337 = pnand %p335, %p336
      %p338 = pneg %p337
      // Predicated region
      $region45: #{tpu_custom_call.1} parent=5 // pred_check
        _
      $region46: #{tpu_custom_call.1} parent=5 // pred_check_branch
        %340 = sbr.rel (%p337) target = $region48
      $region47: #{tpu_custom_call.1} parent=5 // pred_region
        %s341 = ssub.s32 %s21, 1
        // Predicated region
        $region49: #{tpu_custom_call.1} parent=47 // pred_check
          %p342 = pneg %p42
        $region50: #{tpu_custom_call.1} parent=47 // pred_check_branch
          %344 = sbr.rel (%p342) target = $region52
        $region51: #{tpu_custom_call.1} parent=47 // pred_region
          %345 = dma.done [#allocation4], 128
        $region52: #{tpu_custom_call.1} parent=47 // pred_fallthru
          _
        %s346 = sand.u32 %s26, 1
        %s347 = scalar_lea.sflag [#allocation7], %s346
        %s348 = sand.u32 %s55, 1
        %s349 = smul.addr %s348, 64
        %s350 = scalar_lea.vmem [#allocation6], %s349
        // Predicated region
        $region53: #{tpu_custom_call.1} parent=47 // pred_check
          %p351 = pneg %p68
        $region54: #{tpu_custom_call.1} parent=47 // pred_check_branch
          %353 = sbr.rel (%p351) target = $region56
        $region55: #{tpu_custom_call.1} parent=47 // pred_region
          %354 = dma.done %s347, 1024
        $region56: #{tpu_custom_call.1} parent=47 // pred_fallthru
          _
        %s355 = sand.u32 %s26, 1
        %s356 = scalar_lea.sflag [#allocation7], %s355
        %s357 = sand.u32 %s81, 1
        %s358 = smul.addr %s357, 2
        %s359 = scalar_lea.vmem [#allocation8], %s358
        // Predicated region
        $region57: #{tpu_custom_call.1} parent=47 // pred_check
          %p360 = pneg %p94
        $region58: #{tpu_custom_call.1} parent=47 // pred_check_branch
          %362 = sbr.rel (%p360) target = $region60
        $region59: #{tpu_custom_call.1} parent=47 // pred_region
          %363 = dma.done %s356, 32
        $region60: #{tpu_custom_call.1} parent=47 // pred_fallthru
          _
        %s364 = sand.u32 %s26, 1
        %s365 = scalar_lea.sflag [#allocation10], %s364
        %s366 = sand.u32 %s133, 1
        %s367 = smul.addr %s366, 2
        %s368 = scalar_lea.vmem [#allocation9], %s367
        // Predicated region
        $region61: #{tpu_custom_call.1} parent=47 // pred_check
          %p369 = pneg %p146
        $region62: #{tpu_custom_call.1} parent=47 // pred_check_branch
          %371 = sbr.rel (%p369) target = $region64
        $region63: #{tpu_custom_call.1} parent=47 // pred_region
          %372 = dma.done %s365, 32
        $region64: #{tpu_custom_call.1} parent=47 // pred_fallthru
          _
        %s373 = sand.u32 %s26, 1
        %s374 = scalar_lea.sflag [#allocation10], %s373
        %s375 = sand.u32 %s159, 1
        %s376 = smul.addr %s375, 256
        %s377 = scalar_lea.vmem [#allocation11], %s376
        // Predicated region
        $region65: #{tpu_custom_call.1} parent=47 // pred_check
          %p378 = pneg %p172
        $region66: #{tpu_custom_call.1} parent=47 // pred_check_branch
          %380 = sbr.rel (%p378) target = $region68
        $region67: #{tpu_custom_call.1} parent=47 // pred_region
          %381 = dma.done %s374, 4096
        $region68: #{tpu_custom_call.1} parent=47 // pred_fallthru
          _
        %p382 = pneg %p42
        %p383 = pneg %p39
        %s384 = sand.u32 %s26, 1
        %s385 = scalar_lea.sflag [#allocation7], %s384
        %s386 = sand.u32 %s55, 1
        %s387 = smul.addr %s386, 64
        %s388 = scalar_lea.vmem [#allocation6], %s387
        %p389 = pneg %p68
        %p390 = pneg %p65
        %s391 = sand.u32 %s26, 1
        %s392 = scalar_lea.sflag [#allocation7], %s391
        %s393 = sand.u32 %s81, 1
        %s394 = smul.addr %s393, 2
        %s395 = scalar_lea.vmem [#allocation8], %s394
        %p396 = pneg %p94
        %p397 = pneg %p91
        %s398 = smul.u32 2, %s26
        %p399 = scmp.lt.s32.totalorder %s398, 7
        %s400 = scalar_select %p399, %s398, 7
        %s401 = scalar_lea.vmem %s3, %s400
        %p402 = pneg %p120
        %p403 = pneg %p117
        %s404 = sand.u32 %s26, 1
        %s405 = scalar_lea.sflag [#allocation10], %s404
        %s406 = sand.u32 %s133, 1
        %s407 = smul.addr %s406, 2
        %s408 = scalar_lea.vmem [#allocation9], %s407
        %p409 = pneg %p146
        %p410 = pneg %p143
        %s411 = sand.u32 %s26, 1
        %s412 = scalar_lea.sflag [#allocation10], %s411
        %s413 = sand.u32 %s159, 1
        %s414 = smul.addr %s413, 256
        %s415 = scalar_lea.vmem [#allocation11], %s414
        %p416 = pneg %p172
        %p417 = pneg %p169
        %p418 = pneg %p193
        %p419 = pneg %p190
        %p420 = pneg %p214
        %p421 = pneg %p211
        %s422 = smul.u32 2, %s26
        %s423 = smul.u32 2, %s26
        %s424 = smul.u32 2, %s26
        %p425 = scmp.lt.s32.totalorder %s424, 7
        %s426 = scalar_select %p425, %s424, 7
        %s427 = scalar_lea.vmem %s3, %s426
        %s428 = smul.u32 2, %s26
        %s429 = smul.u32 2, %s26
        %s430 = smul.u32 32, %s26
        %p431 = scmp.eq.s32.totalorder %s26, 0
        // Predicated region
        $region69: #{tpu_custom_call.1} parent=47 // pred_check
          %p432 = pneg %p431
        $region70: #{tpu_custom_call.1} parent=47 // pred_check_branch
          %434 = sbr.rel (%p432) target = $region72
        $region71: #{tpu_custom_call.1} parent=47 // pred_region
          %435 = vst [vmem:[#allocation2] sm:$0xff] 0.0
        $region72: #{tpu_custom_call.1} parent=47 // pred_fallthru
          _
        %v436 = vld [vmem:[#allocation3] sm:$0xff]
        %v437 = vld [vmem:[%s350] sm:$0xff]
        %v438 = vld [vmem:[%s350 + $0x8] sm:$0xff]
        %v439 = vld [vmem:[%s350 + $0x10] sm:$0xff]
        %v440 = vld [vmem:[%s350 + $0x18] sm:$0xff]
        %v441 = vld [vmem:[%s350 + $0x20] sm:$0xff]
        %v442 = vld [vmem:[%s350 + $0x28] sm:$0xff]
        %v443 = vld [vmem:[%s350 + $0x30] sm:$0xff]
        %v444 = vld [vmem:[%s350 + $0x38] sm:$0xff]
        %v445 = vld [vmem:[%s359] sm:$0x3]
        %v447 = vlaneseq
        %v448 = vshrl.u32 %v447, 7
        %v449 = vsub.s32 0, %v448
        %v450 = vrot.slane %v445, %v449
        %v451 = vlaneseq
        %v452 = vshrl.u32 %v451, 7
        %v453 = vsub.s32 1, %v452
        %v454 = vrot.slane %v445, %v453
        %vm457 = vcmask 261120
        %v459 = vsel %vm457, %v436, 0
        %461 = vmatprep.subr.mxu0 %v438
        %462 = vmatpush1.msra.mxu0 %v437
        %463 = vmatprep.subr.mxu0 %v440
        %464 = vmatpush1.msra.mxu0 %v439
        %465 = vmatprep.subr.mxu0 %v442
        %466 = vmatpush1.msra.mxu0 %v441
        %467 = vmatprep.subr.mxu0 %v444
        %468 = vmatpush1.msra.mxu0 %v443
        %469 = vmatprep.subr.mxu0 0.0
        %470 = vmatpush1.msra.mxu0 0.0
        %471 = vmatprep.subr.mxu0 0.0
        %472 = vmatpush1.msra.mxu0 0.0
        %473 = vmatprep.subr.mxu0 0.0
        %474 = vmatpush1.msra.mxu0 0.0
        %475 = vmatprep.subr.mxu0 0.0
        %476 = vmatpush1.msra.mxu0 0.0
        %477 = vmatprep.subr.mxu0 0.0
        %478 = vmatpush1.msra.mxu0 0.0
        %479 = vmatprep.subr.mxu0 0.0
        %480 = vmatpush1.msra.mxu0 0.0
        %481 = vmatprep.subr.mxu0 0.0
        %482 = vmatpush1.msra.mxu0 0.0
        %483 = vmatprep.subr.mxu0 0.0
        %484 = vmatpush1.msra.mxu0 0.0
        %485 = vmatprep.subr.mxu0 0.0
        %486 = vmatpush1.msra.mxu0 0.0
        %487 = vmatprep.subr.mxu0 0.0
        %488 = vmatpush1.msra.mxu0 0.0
        %489 = vmatprep.subr.mxu0 0.0
        %490 = vmatpush1.msra.mxu0 0.0
        %491 = vmatprep.subr.mxu0 0.0
        %492 = vmatpush1.msra.mxu0 0.0
        %493 = vmatprep.subr.mxu0 0.0
        %494 = vmatpush1.msra.mxu0 0.0
        %495 = vmatprep.subr.mxu0 0.0
        %496 = vmatpush1.msra.mxu0 0.0
        %497 = vmatprep.subr.mxu0 0.0
        %498 = vmatpush1.msra.mxu0 0.0
        %499 = vmatprep.subr.mxu0 0.0
        %500 = vmatpush1.msra.mxu0 0.0
        %501 = vmatprep.subr.mxu0 0.0
        %502 = vmatpush1.msra.mxu0 0.0
        %503 = vmatprep.subr.mxu0 0.0
        %504 = vmatpush1.msra.mxu0 0.0
        %505 = vmatprep.subr.mxu0 0.0
        %506 = vmatpush1.msra.mxu0 0.0
        %507 = vmatprep.subr.mxu0 0.0
        %508 = vmatpush1.msra.mxu0 0.0
        %509 = vmatprep.subr.mxu0 0.0
        %510 = vmatpush1.msra.mxu0 0.0
        %511 = vmatprep.subr.mxu0 0.0
        %512 = vmatpush1.msra.mxu0 0.0
        %513 = vmatprep.subr.mxu0 0.0
        %514 = vmatpush1.msra.mxu0 0.0
        %515 = vmatprep.subr.mxu0 0.0
        %516 = vmatpush1.msra.mxu0 0.0
        %517 = vmatprep.subr.mxu0 0.0
        %518 = vmatpush1.msra.mxu0 0.0
        %519 = vmatprep.subr.mxu0 0.0
        %520 = vmatpush1.msra.mxu0 0.0
        %521 = vmatprep.subr.mxu0 0.0
        %522 = vmatpush1.msra.mxu0 0.0
        %523 = vmatprep.subr.mxu0 0.0
        %524 = vmatpush1.msra.mxu0 0.0
        %525 = vmatprep.mubr.f32.mxu0 0.0
        %526 = vmatmul.mubr.f32.gmra.mrb[0].mxu0 %v459
        %v527 = vpop.f32.mrb[0].mxu0
        %v528 = vadd.f32 %v450, %v527
        %v529 = vpop.f32.mrb[0].mxu0
        %v530 = vadd.f32 %v454, %v529
        %531 = vdwg.mxu0
        %v532 = vrot.slane %v528, 4
        %v533 = vadd.f32 %v528, %v532
        %v534 = vrot.slane %v533, 2
        %v535 = vadd.f32 %v533, %v534
        %v536 = vrot.slane %v535, 1
        %v537 = vadd.f32 %v535, %v536
        %v538 = vrot.slane %v530, 4
        %v539 = vadd.f32 %v530, %v538
        %v540 = vrot.slane %v539, 2
        %v541 = vadd.f32 %v539, %v540
        %v542 = vrot.slane %v541, 1
        %v543 = vadd.f32 %v541, %v542
        %v544 = vmul.f32 %v537, 0.125
        %v545 = vmul.f32 %v543, 0.125
        %v546 = vmul.f32 %v528, %v528
        %v547 = vmul.f32 %v530, %v530
        %v548 = vrot.slane %v546, 4
        %v549 = vadd.f32 %v546, %v548
        %v550 = vrot.slane %v549, 2
        %v551 = vadd.f32 %v549, %v550
        %v552 = vrot.slane %v551, 1
        %v553 = vadd.f32 %v551, %v552
        %v554 = vrot.slane %v547, 4
        %v555 = vadd.f32 %v547, %v554
        %v556 = vrot.slane %v555, 2
        %v557 = vadd.f32 %v555, %v556
        %v558 = vrot.slane %v557, 1
        %v559 = vadd.f32 %v557, %v558
        %v560 = vmul.f32 %v553, 0.125
        %v561 = vmul.f32 %v559, 0.125
        %v562 = vmul.f32 %v544, %v544
        %v563 = vmul.f32 %v545, %v545
        %v564 = vsub.f32 %v560, %v562
        %v565 = vsub.f32 %v561, %v563
        %v566 = vld [vmem:[%s427] sm:$0x3]
        %v567 = vadd.f32 %v564, 1e-05
        %v568 = vadd.f32 %v565, 1e-05
        %v569 = vrsqrt.pop %v567
        %v570 = vrsqrt.pop %v568
        %v573 = vcombine.low %v569, %v570
        %v575 = vunpack.c.l.s4 1966171168
        %v576 = vunpack.c.0.s8 %v575
        %v577 = vlaneseq
        %v578 = vshrl.u32 %v577, 7
        %v579 = vsub.s32 %v576, %v578
        %v580 = vrot.slane %v573, %v579
        %v582 = vunpack.c.l.s4 1966171168
        %v583 = vunpack.c.0.s8 %v582
        %v584 = vlaneseq
        %v585 = vshrl.u32 %v584, 7
        %v586 = vsub.s32 %v583, %v585
        %v587 = vrot.slane %v580, %v586
        %v589 = vmul.f32 %v566, %v587
        %v590 = vld [vmem:[%s368] sm:$0x3]
        %v592 = vlaneseq
        %v593 = vshrl.u32 %v592, 7
        %v594 = vsub.s32 0, %v593
        %v595 = vrot.slane %v589, %v594
        %v596 = vlaneseq
        %v597 = vshrl.u32 %v596, 7
        %v598 = vsub.s32 1, %v597
        %v599 = vrot.slane %v589, %v598
        %v602 = vmul.f32 %v544, %v595
        %v603 = vmul.f32 %v545, %v599
        %v606 = vcombine.low %v602, %v603
        %v608 = vunpack.c.l.s4 1966171168
        %v609 = vunpack.c.0.s8 %v608
        %v610 = vlaneseq
        %v611 = vshrl.u32 %v610, 7
        %v612 = vsub.s32 %v609, %v611
        %v613 = vrot.slane %v606, %v612
        %v615 = vunpack.c.l.s4 1966171168
        %v616 = vunpack.c.0.s8 %v615
        %v617 = vlaneseq
        %v618 = vshrl.u32 %v617, 7
        %v619 = vsub.s32 %v616, %v618
        %v620 = vrot.slane %v613, %v619
        %v622 = vsub.f32 %v590, %v620
        %v623 = vmul.f32 %v528, %v595
        %v624 = vmul.f32 %v530, %v599
        %v626 = vlaneseq
        %v627 = vshrl.u32 %v626, 7
        %v628 = vsub.s32 0, %v627
        %v629 = vrot.slane %v622, %v628
        %v630 = vlaneseq
        %v631 = vshrl.u32 %v630, 7
        %v632 = vsub.s32 1, %v631
        %v633 = vrot.slane %v622, %v632
        %v636 = vadd.f32 %v623, %v629
        %v637 = vadd.f32 %v624, %v633
        %v638 = vmax.f32 %v636, 0.0
        %v639 = vmax.f32 %v637, 0.0
        %v640 = vld [vmem:[#allocation2] sm:$0xff]
        %v641 = vld [vmem:[%s377] sm:$0xff]
        %v642 = vld [vmem:[%s377 + $0x8] sm:$0xff]
        %v643 = vld [vmem:[%s377 + $0x10] sm:$0xff]
        %v644 = vld [vmem:[%s377 + $0x18] sm:$0xff]
        %v645 = vld [vmem:[%s377 + $0x20] sm:$0xff]
        %v646 = vld [vmem:[%s377 + $0x28] sm:$0xff]
        %v647 = vld [vmem:[%s377 + $0x30] sm:$0xff]
        %v648 = vld [vmem:[%s377 + $0x38] sm:$0xff]
        %v649 = vld [vmem:[%s377 + $0x40] sm:$0xff]
        %v650 = vld [vmem:[%s377 + $0x48] sm:$0xff]
        %v651 = vld [vmem:[%s377 + $0x50] sm:$0xff]
        %v652 = vld [vmem:[%s377 + $0x58] sm:$0xff]
        %v653 = vld [vmem:[%s377 + $0x60] sm:$0xff]
        %v654 = vld [vmem:[%s377 + $0x68] sm:$0xff]
        %v655 = vld [vmem:[%s377 + $0x70] sm:$0xff]
        %v656 = vld [vmem:[%s377 + $0x78] sm:$0xff]
        %v657 = vld [vmem:[%s377 + $0x80] sm:$0xff]
        %v658 = vld [vmem:[%s377 + $0x88] sm:$0xff]
        %v659 = vld [vmem:[%s377 + $0x90] sm:$0xff]
        %v660 = vld [vmem:[%s377 + $0x98] sm:$0xff]
        %v661 = vld [vmem:[%s377 + $0xa0] sm:$0xff]
        %v662 = vld [vmem:[%s377 + $0xa8] sm:$0xff]
        %v663 = vld [vmem:[%s377 + $0xb0] sm:$0xff]
        %v664 = vld [vmem:[%s377 + $0xb8] sm:$0xff]
        %v665 = vld [vmem:[%s377 + $0xc0] sm:$0xff]
        %v666 = vld [vmem:[%s377 + $0xc8] sm:$0xff]
        %v667 = vld [vmem:[%s377 + $0xd0] sm:$0xff]
        %v668 = vld [vmem:[%s377 + $0xd8] sm:$0xff]
        %v669 = vld [vmem:[%s377 + $0xe0] sm:$0xff]
        %v670 = vld [vmem:[%s377 + $0xe8] sm:$0xff]
        %v671 = vld [vmem:[%s377 + $0xf0] sm:$0xff]
        %v672 = vld [vmem:[%s377 + $0xf8] sm:$0xff]
        %673 = vmatprep.subr.mxu0 0.0
        %674 = vmatpush1.msra.mxu0 %v641
        %675 = vmatprep.subr.mxu0 0.0
        %676 = vmatpush1.msra.mxu0 %v642
        %677 = vmatprep.subr.mxu0 0.0
        %678 = vmatpush1.msra.mxu0 %v643
        %679 = vmatprep.subr.mxu0 0.0
        %680 = vmatpush1.msra.mxu0 %v644
        %681 = vmatprep.subr.mxu0 0.0
        %682 = vmatpush1.msra.mxu0 %v645
        %683 = vmatprep.subr.mxu0 0.0
        %684 = vmatpush1.msra.mxu0 %v646
        %685 = vmatprep.subr.mxu0 0.0
        %686 = vmatpush1.msra.mxu0 %v647
        %687 = vmatprep.subr.mxu0 0.0
        %688 = vmatpush1.msra.mxu0 %v648
        %689 = vmatprep.subr.mxu0 0.0
        %690 = vmatpush1.msra.mxu0 %v649
        %691 = vmatprep.subr.mxu0 0.0
        %692 = vmatpush1.msra.mxu0 %v650
        %693 = vmatprep.subr.mxu0 0.0
        %694 = vmatpush1.msra.mxu0 %v651
        %695 = vmatprep.subr.mxu0 0.0
        %696 = vmatpush1.msra.mxu0 %v652
        %697 = vmatprep.subr.mxu0 0.0
        %698 = vmatpush1.msra.mxu0 %v653
        %699 = vmatprep.subr.mxu0 0.0
        %700 = vmatpush1.msra.mxu0 %v654
        %701 = vmatprep.subr.mxu0 0.0
        %702 = vmatpush1.msra.mxu0 %v655
        %703 = vmatprep.subr.mxu0 0.0
        %704 = vmatpush1.msra.mxu0 %v656
        %705 = vmatprep.subr.mxu0 0.0
        %706 = vmatpush1.msra.mxu0 %v657
        %707 = vmatprep.subr.mxu0 0.0
        %708 = vmatpush1.msra.mxu0 %v658
        %709 = vmatprep.subr.mxu0 0.0
        %710 = vmatpush1.msra.mxu0 %v659
        %711 = vmatprep.subr.mxu0 0.0
        %712 = vmatpush1.msra.mxu0 %v660
        %713 = vmatprep.subr.mxu0 0.0
        %714 = vmatpush1.msra.mxu0 %v661
        %715 = vmatprep.subr.mxu0 0.0
        %716 = vmatpush1.msra.mxu0 %v662
        %717 = vmatprep.subr.mxu0 0.0
        %718 = vmatpush1.msra.mxu0 %v663
        %719 = vmatprep.subr.mxu0 0.0
        %720 = vmatpush1.msra.mxu0 %v664
        %721 = vmatprep.subr.mxu0 0.0
        %722 = vmatpush1.msra.mxu0 %v665
        %723 = vmatprep.subr.mxu0 0.0
        %724 = vmatpush1.msra.mxu0 %v666
        %725 = vmatprep.subr.mxu0 0.0
        %726 = vmatpush1.msra.mxu0 %v667
        %727 = vmatprep.subr.mxu0 0.0
        %728 = vmatpush1.msra.mxu0 %v668
        %729 = vmatprep.subr.mxu0 0.0
        %730 = vmatpush1.msra.mxu0 %v669
        %731 = vmatprep.subr.mxu0 0.0
        %732 = vmatpush1.msra.mxu0 %v670
        %733 = vmatprep.subr.mxu0 0.0
        %734 = vmatpush1.msra.mxu0 %v671
        %735 = vmatprep.subr.mxu0 0.0
        %736 = vmatpush1.msra.mxu0 %v672
        %737 = vmatprep.mubr.f32.mxu0 %v639
        %738 = vmatmul.mubr.f32.gmra.mrb[0].mxu0 %v638
        %v739 = vpop.f32.mrb[0].mxu0
        %v740 = vadd.f32 0.0, %v739
        %v741 = vpop.f32.mrb[0].mxu0
        %742 = vdwg.mxu0
        %v743 = vadd.f32 %v640, %v740
        %744 = vst [vmem:[#allocation2] sm:$0xff] %v743
        %p745 = scmp.eq.s32.totalorder %s26, 3
        // Predicated region
        $region73: #{tpu_custom_call.1} parent=47 // pred_check
          %p746 = pneg %p745
        $region74: #{tpu_custom_call.1} parent=47 // pred_check_branch
          %748 = sbr.rel (%p746) target = $region76
        $region75: #{tpu_custom_call.1} parent=47 // pred_region
          %v749 = vld [vmem:[#allocation2] sm:$0xff]
          %v750 = vld [vmem:[%s6] sm:$0x1]
          %v752 = vlaneseq
          %v753 = vshrl.u32 %v752, 7
          %v754 = vsub.s32 0, %v753
          %v755 = vrot.slane %v750, %v754
          %v757 = vadd.f32 %v749, %v755
          %v758 = vsub.f32 0.0, %v757
          %v759 = vmul.f32 %v758, 1.442695
          %v760 = vpow.pop %v759
          %v761 = vadd.f32 %v760, 1.0
          %v762 = vrcp.pop %v761
          %763 = vst [vmem:[#allocation12] sm:$0xff] %v762
        $region76: #{tpu_custom_call.1} parent=47 // pred_fallthru
          _
        // Predicated region
        $region77: #{tpu_custom_call.1} parent=47 // pred_check
          %p764 = pneg %p211
        $region78: #{tpu_custom_call.1} parent=47 // pred_check_branch
          %766 = sbr.rel (%p764) target = $region80
        $region79: #{tpu_custom_call.1} parent=47 // pred_region
          %s768 = ssub.s32 128, 128
          %769 = vsyncadd [#allocation5], %s768
          %s771 = sshll.u32 [#allocation12], 4
          %s772 = int_to_ptr.vmem [resolvable:$true] %s771
          %774 = dma.vmem_to_hbm [thread:$0]  %s772, 128, %s7, [#allocation5]
        $region80: #{tpu_custom_call.1} parent=47 // pred_fallthru
          _
        // Predicated region
        $region81: #{tpu_custom_call.1} parent=47 // pred_check
          %p775 = pneg %p211
        $region82: #{tpu_custom_call.1} parent=47 // pred_check_branch
          %777 = sbr.rel (%p775) target = $region84
        $region83: #{tpu_custom_call.1} parent=47 // pred_region
          %778 = dma.done [#allocation5], 128
        $region84: #{tpu_custom_call.1} parent=47 // pred_fallthru
          _
      $region48: #{tpu_custom_call.1} parent=5 // pred_fallthru
        _
      %p779 = scmp.le.s32.totalorder 2, %s21
      // Predicated region
      $region85: #{tpu_custom_call.1} parent=5 // pred_check
        %p780 = pneg %p779
      $region86: #{tpu_custom_call.1} parent=5 // pred_check_branch
        %782 = sbr.rel (%p780) target = $region88
      $region87: #{tpu_custom_call.1} parent=5 // pred_region
        %s783 = ssub.s32 %s21, 2
      $region88: #{tpu_custom_call.1} parent=5 // pred_fallthru
        _
    $region6: #{tpu_custom_call.1} parent=1 // loop_footer
      %s25 = sadd.s32 1, %s21
    $region7: #{tpu_custom_call.1} parent=1 // loop_footer_branch
      %20 = sbr.rel target = $region3
    $region8: #{tpu_custom_call.1} parent=1 // loop_exit
      _
    %784 = vsyncpa [#allocation4], 1
    %s785 = scalar_lea.sflag [#allocation4], 1
    %786 = vsyncpa %s785, 1
    %787 = vsyncpa [#allocation7], 1
    %s788 = scalar_lea.sflag [#allocation7], 1
    %789 = vsyncpa %s788, 1
    %790 = vsyncpa [#allocation10], 1
    %s791 = scalar_lea.sflag [#allocation10], 1
    %792 = vsyncpa %s791, 1
    %793 = vsyncpa [#allocation5], 1
    %s794 = scalar_lea.sflag [#allocation5], 1
    %795 = vsyncpa %s794, 1

</llo_original>
